<compile_context>
chip_gen: v7x
topology: tpu7x:2x2x1
jax: 0.10.0
libtpu: 0.0.40
codegen_flags: <defaults>
</compile_context>

<pallas_src>
import string

import jax
import jax.numpy as jnp
from jax import lax
from jax.experimental import pallas as pl
from jax.experimental.pallas import tpu as pltpu

all_letters = string.ascii_letters + " .,;'"
n_letters = len(all_letters)        # 57
n_hidden = 128
n_categories = 18                   # the tutorial has 18 language categories

CAT_PAD = 128                       # 18 -> lane-dense output width


def _make_rnn_kernel(seq_len: int):
    """Build a whole-sequence RNN kernel for a (static) sequence length."""

    def kernel(xb_ref,    # (seq_len, 1, n_hidden)  precomputed Wxh[letter_t] + bh
               h0_ref,    # (1, n_hidden)
               whh_ref,   # (n_hidden, n_hidden)
               xo_ref,    # (1, CAT_PAD)            precomputed Wxo[letter_last] + bo (zero-padded)
               who_ref,   # (n_hidden, CAT_PAD)     zero-padded columns >= n_categories
               out_ref,   # (1, CAT_PAD)
               hid_ref):  # (1, n_hidden)
        # Loop-invariant hoist: read the recurrent weight from VMEM once.
        whh = whh_ref[...]                                   # (H, H) f32

        def step(t, h):
            # h_{t+1} = i2h(cat(x_t, h_t)) = Wxh[letter_t] + bh + h_t @ Whh
            return xb_ref[t] + jnp.dot(h, whh,
                                       preferred_element_type=jnp.float32)

        # Run the first seq_len-1 recurrence steps fully unrolled; h_pre is the
        # hidden state the module holds when it consumes the LAST character
        # (i.e. the hidden that feeds the returned output).
        h_pre = lax.fori_loop(0, seq_len - 1, step, h0_ref[...], unroll=True)

        # Final hidden update (uses the last character's input row).
        hid_ref[...] = step(seq_len - 1, h_pre)

        # Output projection + log_softmax, computed only for the last step and
        # only where it is consumed.  Pad lanes (>= n_categories) hold junk but
        # are excluded from the LSE and sliced off in the wrapper.
        logits = xo_ref[...] + jnp.dot(h_pre, who_ref[...],
                                       preferred_element_type=jnp.float32)
        valid = logits[:, :n_categories]
        m = jnp.max(valid, axis=1, keepdims=True)
        lse = jnp.log(jnp.sum(jnp.exp(valid - m), axis=1, keepdims=True)) + m
        out_ref[...] = logits - lse                          # lane-dense (1, 128) store

    return kernel


def rnn_forward(letter_idx, h0, kernel_params):
    """Run the whole character sequence in one fused, grid-less kernel call.

    Returns (log_probs_of_last_step (1, n_categories), final_hidden (1, n_hidden)),
    matching the PyTorch loop `for t: output, hidden = rnn(line[t], hidden)`.
    """
    wxh, whh, bh, wxo, who_pad, bo = kernel_params
    seq_len = int(letter_idx.shape[0])

    # x_t is one-hot(letter_t)  =>  x_t @ W == W[letter_t, :].
    # Precompute every per-step input contribution OUTSIDE the kernel so the
    # serial recurrence has no gather / scalar-address dependence on its
    # critical path.
    xb = (jnp.take(wxh, letter_idx, axis=0) + bh).reshape(seq_len, 1, n_hidden)
    xo_valid = jnp.take(wxo, letter_idx[-1:], axis=0) + bo           # (1, n_categories)
    xo_last = jnp.zeros((1, CAT_PAD), jnp.float32).at[:, :n_categories].set(xo_valid)

    vmem = pltpu.MemorySpace.VMEM
    out_pad, hid = pl.pallas_call(
        _make_rnn_kernel(seq_len),
        out_shape=(jax.ShapeDtypeStruct((1, CAT_PAD), jnp.float32),
                   jax.ShapeDtypeStruct((1, n_hidden), jnp.float32)),
        # No grid: one kernel invocation, every operand is a full array resident
        # in VMEM (total footprint ~100 KiB -- trivially within budget on
        # v5e/v6e/v7x, so no tiling / double-buffering machinery is needed).
        in_specs=[pl.BlockSpec(memory_space=vmem) for _ in range(5)],
        out_specs=(pl.BlockSpec(memory_space=vmem),
                   pl.BlockSpec(memory_space=vmem)),
    )(xb, h0, whh, xo_last, who_pad)
    return out_pad[:, :n_categories], hid


def init_params(key):
    """nn.Linear-style init U(-1/sqrt(fan_in), 1/sqrt(fan_in)).

    Returns (unpadded reference params, kernel params with lane-padded Who)."""
    fan_in = n_letters + n_hidden
    bound = 1.0 / float(fan_in) ** 0.5
    k = jax.random.split(key, 4)
    w_i2h = jax.random.uniform(k[0], (fan_in, n_hidden), jnp.float32, -bound, bound)
    b_i2h = jax.random.uniform(k[1], (1, n_hidden), jnp.float32, -bound, bound)
    w_i2o = jax.random.uniform(k[2], (fan_in, n_categories), jnp.float32, -bound, bound)
    b_i2o = jax.random.uniform(k[3], (1, n_categories), jnp.float32, -bound, bound)

    wxh, whh = w_i2h[:n_letters], w_i2h[n_letters:]
    wxo, who = w_i2o[:n_letters], w_i2o[n_letters:]
    ref_params = (wxh, whh, b_i2h, wxo, who, b_i2o)

    who_pad = jnp.zeros((n_hidden, CAT_PAD), jnp.float32).at[:, :n_categories].set(who)
    kernel_params = (wxh, whh, b_i2h, wxo, who_pad, b_i2o)
    return ref_params, kernel_params


def letter_to_index(letter):
    return all_letters.find(letter)


def line_to_indices(line):
    return jnp.array([letter_to_index(c) for c in line], jnp.int32)


def reference_forward(letter_idx, h0, ref_params):
    """Pure-JAX step-by-step reference matching the PyTorch module."""
    wxh, whh, bh, wxo, who, bo = ref_params
    h = h0
    out = None
    for i in list(letter_idx):
        x = jax.nn.one_hot(i, n_letters, dtype=jnp.float32)[None, :]   # (1, 57)
        new_h = x @ wxh + h @ whh + bh
        logits = x @ wxo + h @ who + bo
        out = jax.nn.log_softmax(logits, axis=1)
        h = new_h
    return out, h


if __name__ == "__main__":
    key = jax.random.PRNGKey(0)
    ref_params, kernel_params = init_params(key)

    letter_idx = line_to_indices("Albert")                 # (6,) int32
    h0 = jnp.zeros((1, n_hidden), jnp.float32)

    out, hid = rnn_forward(letter_idx, h0, kernel_params)
    out = jax.block_until_ready(out)
    hid = jax.block_until_ready(hid)

    out_ref, hid_ref = reference_forward(letter_idx, h0, ref_params)

    assert out.shape == (1, n_categories)
    assert hid.shape == (1, n_hidden)
    assert jnp.allclose(out, out_ref, atol=1e-5, rtol=1e-5)
    assert jnp.allclose(hid, hid_ref, atol=1e-5, rtol=1e-5)
    print("KERNEL_OK")
</pallas_src>

<mosaic_0001>
module attributes {stable_mosaic.version = 11 : i64} {
  func.func @kernel(%arg0: memref<6x1x128xf32, #tpu.memory_space<vmem>>, %arg1: memref<1x128xf32, #tpu.memory_space<vmem>>, %arg2: memref<128x128xf32, #tpu.memory_space<vmem>>, %arg3: memref<1x128xf32, #tpu.memory_space<vmem>>, %arg4: memref<128x128xf32, #tpu.memory_space<vmem>>, %arg5: memref<1x128xf32, #tpu.memory_space<vmem>>, %arg6: memref<1x128xf32, #tpu.memory_space<vmem>>) attributes {dimension_semantics = [], scalar_prefetch = 0 : i64, scratch_operands = 0 : i64, tpu.core_type = #tpu.core_type<tc>} {
    %c0 = arith.constant 0 : index
    %c0_0 = arith.constant 0 : index
    %0 = vector.load %arg2[%c0, %c0_0] : memref<128x128xf32, #tpu.memory_space<vmem>>, vector<128x128xf32>
    %c0_1 = arith.constant 0 : index
    %c0_2 = arith.constant 0 : index
    %1 = vector.load %arg1[%c0_1, %c0_2] : memref<1x128xf32, #tpu.memory_space<vmem>>, vector<1x128xf32>
    %c0_i32 = arith.constant 0 : i32
    %2 = arith.index_cast %c0_i32 : i32 to index
    %c0_3 = arith.constant 0 : index
    %c0_4 = arith.constant 0 : index
    %3 = vector.load %arg0[%2, %c0_3, %c0_4] : memref<6x1x128xf32, #tpu.memory_space<vmem>>, vector<1x1x128xf32>
    %4 = vector.shape_cast %3 : vector<1x1x128xf32> to vector<1x128xf32>
    %cst = arith.constant dense<0.000000e+00> : vector<1x128xf32>
    %5 = tpu.matmul %1, %0, %cst {dimension_numbers = #tpu.dot_dimension_numbers<[1], [0], [0], [1], [0, 0, 1, 1], [], []>} : vector<1x128xf32>, vector<128x128xf32>, vector<1x128xf32> -> vector<1x128xf32>
    %6 = arith.addf %4, %5 : vector<1x128xf32>
    %c1_i32 = arith.constant 1 : i32
    %7 = arith.index_cast %c1_i32 : i32 to index
    %c0_5 = arith.constant 0 : index
    %c0_6 = arith.constant 0 : index
    %8 = vector.load %arg0[%7, %c0_5, %c0_6] : memref<6x1x128xf32, #tpu.memory_space<vmem>>, vector<1x1x128xf32>
    %9 = vector.shape_cast %8 : vector<1x1x128xf32> to vector<1x128xf32>
    %cst_7 = arith.constant dense<0.000000e+00> : vector<1x128xf32>
    %10 = tpu.matmul %6, %0, %cst_7 {dimension_numbers = #tpu.dot_dimension_numbers<[1], [0], [0], [1], [0, 0, 1, 1], [], []>} : vector<1x128xf32>, vector<128x128xf32>, vector<1x128xf32> -> vector<1x128xf32>
    %11 = arith.addf %9, %10 : vector<1x128xf32>
    %c2_i32 = arith.constant 2 : i32
    %12 = arith.index_cast %c2_i32 : i32 to index
    %c0_8 = arith.constant 0 : index
    %c0_9 = arith.constant 0 : index
    %13 = vector.load %arg0[%12, %c0_8, %c0_9] : memref<6x1x128xf32, #tpu.memory_space<vmem>>, vector<1x1x128xf32>
    %14 = vector.shape_cast %13 : vector<1x1x128xf32> to vector<1x128xf32>
    %cst_10 = arith.constant dense<0.000000e+00> : vector<1x128xf32>
    %15 = tpu.matmul %11, %0, %cst_10 {dimension_numbers = #tpu.dot_dimension_numbers<[1], [0], [0], [1], [0, 0, 1, 1], [], []>} : vector<1x128xf32>, vector<128x128xf32>, vector<1x128xf32> -> vector<1x128xf32>
    %16 = arith.addf %14, %15 : vector<1x128xf32>
    %c3_i32 = arith.constant 3 : i32
    %17 = arith.index_cast %c3_i32 : i32 to index
    %c0_11 = arith.constant 0 : index
    %c0_12 = arith.constant 0 : index
    %18 = vector.load %arg0[%17, %c0_11, %c0_12] : memref<6x1x128xf32, #tpu.memory_space<vmem>>, vector<1x1x128xf32>
    %19 = vector.shape_cast %18 : vector<1x1x128xf32> to vector<1x128xf32>
    %cst_13 = arith.constant dense<0.000000e+00> : vector<1x128xf32>
    %20 = tpu.matmul %16, %0, %cst_13 {dimension_numbers = #tpu.dot_dimension_numbers<[1], [0], [0], [1], [0, 0, 1, 1], [], []>} : vector<1x128xf32>, vector<128x128xf32>, vector<1x128xf32> -> vector<1x128xf32>
    %21 = arith.addf %19, %20 : vector<1x128xf32>
    %c4_i32 = arith.constant 4 : i32
    %22 = arith.index_cast %c4_i32 : i32 to index
    %c0_14 = arith.constant 0 : index
    %c0_15 = arith.constant 0 : index
    %23 = vector.load %arg0[%22, %c0_14, %c0_15] : memref<6x1x128xf32, #tpu.memory_space<vmem>>, vector<1x1x128xf32>
    %24 = vector.shape_cast %23 : vector<1x1x128xf32> to vector<1x128xf32>
    %cst_16 = arith.constant dense<0.000000e+00> : vector<1x128xf32>
    %25 = tpu.matmul %21, %0, %cst_16 {dimension_numbers = #tpu.dot_dimension_numbers<[1], [0], [0], [1], [0, 0, 1, 1], [], []>} : vector<1x128xf32>, vector<128x128xf32>, vector<1x128xf32> -> vector<1x128xf32>
    %26 = arith.addf %24, %25 : vector<1x128xf32>
    %c5_i32 = arith.constant 5 : i32
    %c5 = arith.constant 5 : index
    %c0_17 = arith.constant 0 : index
    %c0_18 = arith.constant 0 : index
    %27 = vector.load %arg0[%c5, %c0_17, %c0_18] : memref<6x1x128xf32, #tpu.memory_space<vmem>>, vector<1x1x128xf32>
    %28 = vector.shape_cast %27 : vector<1x1x128xf32> to vector<1x128xf32>
    %cst_19 = arith.constant dense<0.000000e+00> : vector<1x128xf32>
    %29 = tpu.matmul %26, %0, %cst_19 {dimension_numbers = #tpu.dot_dimension_numbers<[1], [0], [0], [1], [0, 0, 1, 1], [], []>} : vector<1x128xf32>, vector<128x128xf32>, vector<1x128xf32> -> vector<1x128xf32>
    %30 = arith.addf %28, %29 : vector<1x128xf32>
    %c0_20 = arith.constant 0 : index
    %c0_21 = arith.constant 0 : index
    %31 = vector.load %arg6[%c0_20, %c0_21] : memref<1x128xf32, #tpu.memory_space<vmem>>, vector<1x128xf32>
    tpu.vector_store %arg6[%c0_20, %c0_21], %30 {strides = array<i32>} : memref<1x128xf32, #tpu.memory_space<vmem>>, vector<1x128xf32>,
    %c0_22 = arith.constant 0 : index
    %c0_23 = arith.constant 0 : index
    %32 = vector.load %arg3[%c0_22, %c0_23] : memref<1x128xf32, #tpu.memory_space<vmem>>, vector<1x128xf32>
    %c0_24 = arith.constant 0 : index
    %c0_25 = arith.constant 0 : index
    %33 = vector.load %arg4[%c0_24, %c0_25] : memref<128x128xf32, #tpu.memory_space<vmem>>, vector<128x128xf32>
    %cst_26 = arith.constant dense<0.000000e+00> : vector<1x128xf32>
    %34 = tpu.matmul %26, %33, %cst_26 {dimension_numbers = #tpu.dot_dimension_numbers<[1], [0], [0], [1], [0, 0, 1, 1], [], []>} : vector<1x128xf32>, vector<128x128xf32>, vector<1x128xf32> -> vector<1x128xf32>
    %35 = arith.addf %32, %34 : vector<1x128xf32>
    %36 = vector.extract_strided_slice %35 {offsets = [0, 0], sizes = [1, 18], strides = [1, 1]} : vector<1x128xf32> to vector<1x18xf32>
    %cst_27 = arith.constant dense<0xFF800000> : vector<1xf32>
    %37 = vector.multi_reduction <maximumf>, %36, %cst_27 [1] : vector<1x18xf32> to vector<1xf32>
    %38 = vector.shape_cast %37 : vector<1xf32> to vector<1x1xf32>
    %39 = vector.broadcast %38 : vector<1x1xf32> to vector<1x18xf32>
    %40 = arith.subf %36, %39 : vector<1x18xf32>
    %41 = math.exp %40 : vector<1x18xf32>
    %cst_28 = arith.constant dense<0.000000e+00> : vector<1xf32>
    %42 = vector.multi_reduction <add>, %41, %cst_28 [1] : vector<1x18xf32> to vector<1xf32>
    %43 = vector.shape_cast %42 : vector<1xf32> to vector<1x1xf32>
    %44 = math.log %43 : vector<1x1xf32>
    %45 = arith.addf %44, %38 : vector<1x1xf32>
    %46 = vector.broadcast %45 : vector<1x1xf32> to vector<1x128xf32>
    %47 = arith.subf %35, %46 : vector<1x128xf32>
    %c0_29 = arith.constant 0 : index
    %c0_30 = arith.constant 0 : index
    %48 = vector.load %arg5[%c0_29, %c0_30] : memref<1x128xf32, #tpu.memory_space<vmem>>, vector<1x128xf32>
    tpu.vector_store %arg5[%c0_29, %c0_30], %47 {strides = array<i32>} : memref<1x128xf32, #tpu.memory_space<vmem>>, vector<1x128xf32>,
    return
  }
}

</mosaic_0001>

<llo_original>
// kernel: tpu_custom_call.1
$region0: #{tpu_custom_call.1}
  #allocation0 [shape = 'u32[]', space=smem, size = 0x4, offset = 0x4, fixed_abs, tag = 'smem constant byte address 0x4 - core index']
  #allocation1 [shape = 'u32[144,128]{1,0:T(1,128)}', space=vmem, size = 0x12000, scoped, tag = 'internal scratch']
  %s0 = inlined_call_operand.hbm [shape: f32[6,1,128], index: 0, kind: input, shape index: {}]
  %s1 = inlined_call_operand.vmem [shape: f32[1,128], index: 1, kind: input, shape index: {}]
  %s2 = inlined_call_operand.hbm [shape: f32[128,128], index: 2, kind: input, shape index: {}]
  %s3 = inlined_call_operand.vmem [shape: f32[1,128], index: 3, kind: input, shape index: {}]
  %s4 = inlined_call_operand.hbm [shape: f32[128,128], index: 4, kind: input, shape index: {}]
  %s5 = inlined_call_operand.hbm [shape: f32[1,128], index: 5, kind: output, shape index: {0}]
  %s6 = inlined_call_operand.hbm [shape: f32[1,128], index: 6, kind: output, shape index: {1}]
  %7 = xla_tuple %s5, %s6
  %s8 = sld [smem:[#allocation0]]
  $region50: #{tpu_custom_call.1} parent=0
    _
  %s10 = ssub.s32 1, %s8
  %s11 = scalar_select 0, %s10, %s8
  $region1: #{tpu_custom_call.1} parent=0
    #allocation2 [shape = 'u8[3072]{0}', space=vmem, size = 0xc00, scoped, tag = 'input window, operand 0, single buffered']
    #allocation3 [shape = 's32[1]{0}', space=sflag, size = 0x4, scoped, tag = 'scoped memory for tpu_custom_call.1']
    #allocation4 [shape = 's32[1]{0}', space=sflag, size = 0x4, scoped, tag = 'scoped memory for tpu_custom_call.1']
    #allocation5 [shape = 'u8[65536]{0}', space=vmem, size = 0x10000, scoped, tag = 'input window, operand 2, single buffered']
    #allocation6 [shape = 's32[1]{0}', space=sflag, size = 0x4, scoped, tag = 'scoped memory for tpu_custom_call.1']
    #allocation7 [shape = 'u8[65536]{0}', space=vmem, size = 0x10000, scoped, tag = 'input window, operand 4, single buffered']
    #allocation8 [shape = 'u8[512]{0}', space=vmem, size = 0x400, scoped, tag = 'output window, operand 0, single buffered']
    #allocation9 [shape = 'u8[512]{0}', space=vmem, size = 0x400, scoped, tag = 'output window, operand 1, single buffered']
    #allocation10 [shape = 's32[1]{0}', space=sflag, size = 0x4, scoped, tag = 'scoped memory for tpu_custom_call.1']
    %12 = vsyncpa [#allocation3], 0
    %13 = vsyncpa [#allocation6], 0
    %14 = vsyncpa [#allocation4], 0
    %15 = vsyncpa [#allocation10], 0
    // Predicated region
    $region2: #{tpu_custom_call.1} parent=1 // pred_check
      _
    $region3: #{tpu_custom_call.1} parent=1 // pred_check_branch
      %17 = sbr.rel (0) target = $region5
    $region4: #{tpu_custom_call.1} parent=1 // pred_region
      %s19 = ssub.s32 96, 96
      %20 = vsyncadd [#allocation3], %s19
      %s21 = sshll.u32 [#allocation2], 4
      %s22 = int_to_ptr.vmem [resolvable:$true] %s21
      %27 = dma.hbm_to_vmem [thread:$0]  %s0, 96, %s22, [#allocation3], 16, 16, 1
    $region5: #{tpu_custom_call.1} parent=1 // pred_fallthru
      _
    // Predicated region
    $region6: #{tpu_custom_call.1} parent=1 // pred_check
      _
    $region7: #{tpu_custom_call.1} parent=1 // pred_check_branch
      %29 = sbr.rel (0) target = $region9
    $region8: #{tpu_custom_call.1} parent=1 // pred_region
      _
    $region9: #{tpu_custom_call.1} parent=1 // pred_fallthru
      _
    // Predicated region
    $region10: #{tpu_custom_call.1} parent=1 // pred_check
      _
    $region11: #{tpu_custom_call.1} parent=1 // pred_check_branch
      %31 = sbr.rel (0) target = $region13
    $region12: #{tpu_custom_call.1} parent=1 // pred_region
      %s33 = ssub.s32 2048, 2048
      %34 = vsyncadd [#allocation6], %s33
      %s35 = sshll.u32 [#allocation5], 4
      %s36 = int_to_ptr.vmem [resolvable:$true] %s35
      %41 = dma.hbm_to_vmem [thread:$0]  %s2, 2048, %s36, [#allocation6], 128, 128, 8
    $region13: #{tpu_custom_call.1} parent=1 // pred_fallthru
      _
    // Predicated region
    $region14: #{tpu_custom_call.1} parent=1 // pred_check
      _
    $region15: #{tpu_custom_call.1} parent=1 // pred_check_branch
      %43 = sbr.rel (0) target = $region17
    $region16: #{tpu_custom_call.1} parent=1 // pred_region
      _
    $region17: #{tpu_custom_call.1} parent=1 // pred_fallthru
      _
    // Predicated region
    $region18: #{tpu_custom_call.1} parent=1 // pred_check
      _
    $region19: #{tpu_custom_call.1} parent=1 // pred_check_branch
      %45 = sbr.rel (0) target = $region21
    $region20: #{tpu_custom_call.1} parent=1 // pred_region
      %s47 = ssub.s32 2048, 2048
      %48 = vsyncadd [#allocation6], %s47
      %s49 = sshll.u32 [#allocation7], 4
      %s50 = int_to_ptr.vmem [resolvable:$true] %s49
      %55 = dma.hbm_to_vmem [thread:$0]  %s4, 2048, %s50, [#allocation6], 128, 128, 8
    $region21: #{tpu_custom_call.1} parent=1 // pred_fallthru
      _
    // Predicated region
    $region22: #{tpu_custom_call.1} parent=1 // pred_check
      _
    $region23: #{tpu_custom_call.1} parent=1 // pred_check_branch
      %57 = sbr.rel (0) target = $region25
    $region24: #{tpu_custom_call.1} parent=1 // pred_region
      %58 = dma.done [#allocation3], 96
    $region25: #{tpu_custom_call.1} parent=1 // pred_fallthru
      _
    // Predicated region
    $region26: #{tpu_custom_call.1} parent=1 // pred_check
      _
    $region27: #{tpu_custom_call.1} parent=1 // pred_check_branch
      %60 = sbr.rel (0) target = $region29
    $region28: #{tpu_custom_call.1} parent=1 // pred_region
      %61 = dma.done [#allocation6], 2048
    $region29: #{tpu_custom_call.1} parent=1 // pred_fallthru
      _
    // Predicated region
    $region30: #{tpu_custom_call.1} parent=1 // pred_check
      _
    $region31: #{tpu_custom_call.1} parent=1 // pred_check_branch
      %63 = sbr.rel (0) target = $region33
    $region32: #{tpu_custom_call.1} parent=1 // pred_region
      %64 = dma.done [#allocation6], 2048
    $region33: #{tpu_custom_call.1} parent=1 // pred_fallthru
      _
    %v65 = vld [vmem:[#allocation5] sm:$0xff]
    %v66 = vld [vmem:[#allocation5 + $0x8] sm:$0xff]
    %v67 = vld [vmem:[#allocation5 + $0x10] sm:$0xff]
    %v68 = vld [vmem:[#allocation5 + $0x18] sm:$0xff]
    %v69 = vld [vmem:[#allocation5 + $0x20] sm:$0xff]
    %v70 = vld [vmem:[#allocation5 + $0x28] sm:$0xff]
    %v71 = vld [vmem:[#allocation5 + $0x30] sm:$0xff]
    %v72 = vld [vmem:[#allocation5 + $0x38] sm:$0xff]
    %v73 = vld [vmem:[#allocation5 + $0x40] sm:$0xff]
    %v74 = vld [vmem:[#allocation5 + $0x48] sm:$0xff]
    %v75 = vld [vmem:[#allocation5 + $0x50] sm:$0xff]
    %v76 = vld [vmem:[#allocation5 + $0x58] sm:$0xff]
    %v77 = vld [vmem:[#allocation5 + $0x60] sm:$0xff]
    %v78 = vld [vmem:[#allocation5 + $0x68] sm:$0xff]
    %v79 = vld [vmem:[#allocation5 + $0x70] sm:$0xff]
    %v80 = vld [vmem:[#allocation5 + $0x78] sm:$0xff]
    %v81 = vld [vmem:[%s1] sm:$0x1]
    %v82 = vld [vmem:[#allocation2] sm:$0x1]
    %83 = vmatprep.subr.mxu0 0.0
    %84 = vmatpush1.msra.mxu0 %v65
    %85 = vmatprep.subr.mxu0 0.0
    %86 = vmatpush1.msra.mxu0 %v66
    %87 = vmatprep.subr.mxu0 0.0
    %88 = vmatpush1.msra.mxu0 %v67
    %89 = vmatprep.subr.mxu0 0.0
    %90 = vmatpush1.msra.mxu0 %v68
    %91 = vmatprep.subr.mxu0 0.0
    %92 = vmatpush1.msra.mxu0 %v69
    %93 = vmatprep.subr.mxu0 0.0
    %94 = vmatpush1.msra.mxu0 %v70
    %95 = vmatprep.subr.mxu0 0.0
    %96 = vmatpush1.msra.mxu0 %v71
    %97 = vmatprep.subr.mxu0 0.0
    %98 = vmatpush1.msra.mxu0 %v72
    %99 = vmatprep.subr.mxu0 0.0
    %100 = vmatpush1.msra.mxu0 %v73
    %101 = vmatprep.subr.mxu0 0.0
    %102 = vmatpush1.msra.mxu0 %v74
    %103 = vmatprep.subr.mxu0 0.0
    %104 = vmatpush1.msra.mxu0 %v75
    %105 = vmatprep.subr.mxu0 0.0
    %106 = vmatpush1.msra.mxu0 %v76
    %107 = vmatprep.subr.mxu0 0.0
    %108 = vmatpush1.msra.mxu0 %v77
    %109 = vmatprep.subr.mxu0 0.0
    %110 = vmatpush1.msra.mxu0 %v78
    %111 = vmatprep.subr.mxu0 0.0
    %112 = vmatpush1.msra.mxu0 %v79
    %113 = vmatprep.subr.mxu0 0.0
    %114 = vmatpush1.msra.mxu0 %v80
    %115 = vmatprep.subr.mxu0 0.0
    %116 = vmatpush1.msra.mxu0 0.0
    %117 = vmatprep.subr.mxu0 0.0
    %118 = vmatpush1.msra.mxu0 0.0
    %119 = vmatprep.subr.mxu0 0.0
    %120 = vmatpush1.msra.mxu0 0.0
    %121 = vmatprep.subr.mxu0 0.0
    %122 = vmatpush1.msra.mxu0 0.0
    %123 = vmatprep.subr.mxu0 0.0
    %124 = vmatpush1.msra.mxu0 0.0
    %125 = vmatprep.subr.mxu0 0.0
    %126 = vmatpush1.msra.mxu0 0.0
    %127 = vmatprep.subr.mxu0 0.0
    %128 = vmatpush1.msra.mxu0 0.0
    %129 = vmatprep.subr.mxu0 0.0
    %130 = vmatpush1.msra.mxu0 0.0
    %131 = vmatprep.subr.mxu0 0.0
    %132 = vmatpush1.msra.mxu0 0.0
    %133 = vmatprep.subr.mxu0 0.0
    %134 = vmatpush1.msra.mxu0 0.0
    %135 = vmatprep.subr.mxu0 0.0
    %136 = vmatpush1.msra.mxu0 0.0
    %137 = vmatprep.subr.mxu0 0.0
    %138 = vmatpush1.msra.mxu0 0.0
    %139 = vmatprep.subr.mxu0 0.0
    %140 = vmatpush1.msra.mxu0 0.0
    %141 = vmatprep.subr.mxu0 0.0
    %142 = vmatpush1.msra.mxu0 0.0
    %143 = vmatprep.subr.mxu0 0.0
    %144 = vmatpush1.msra.mxu0 0.0
    %145 = vmatprep.subr.mxu0 0.0
    %146 = vmatpush1.msra.mxu0 0.0
    %147 = vmatprep.mubr.f32.mxu0 0.0
    %148 = vmatmul.mubr.f32.gmra.mrb[0].mxu0 %v81
    %v149 = vpop.f32.mrb[0].mxu0
    %v150 = vadd.f32 0.0, %v149
    %v151 = vpop.f32.mrb[0].mxu0
    %152 = vdwg.mxu0
    %v153 = vadd.f32 %v82, %v150
    %s154 = scalar_lea.vmem [#allocation2], 1
    %v155 = vld [vmem:[%s154] sm:$0x1]
    %156 = vmatprep.subr.mxu0 0.0
    %157 = vmatpush1.msra.mxu0 %v65
    %158 = vmatprep.subr.mxu0 0.0
    %159 = vmatpush1.msra.mxu0 %v66
    %160 = vmatprep.subr.mxu0 0.0
    %161 = vmatpush1.msra.mxu0 %v67
    %162 = vmatprep.subr.mxu0 0.0
    %163 = vmatpush1.msra.mxu0 %v68
    %164 = vmatprep.subr.mxu0 0.0
    %165 = vmatpush1.msra.mxu0 %v69
    %166 = vmatprep.subr.mxu0 0.0
    %167 = vmatpush1.msra.mxu0 %v70
    %168 = vmatprep.subr.mxu0 0.0
    %169 = vmatpush1.msra.mxu0 %v71
    %170 = vmatprep.subr.mxu0 0.0
    %171 = vmatpush1.msra.mxu0 %v72
    %172 = vmatprep.subr.mxu0 0.0
    %173 = vmatpush1.msra.mxu0 %v73
    %174 = vmatprep.subr.mxu0 0.0
    %175 = vmatpush1.msra.mxu0 %v74
    %176 = vmatprep.subr.mxu0 0.0
    %177 = vmatpush1.msra.mxu0 %v75
    %178 = vmatprep.subr.mxu0 0.0
    %179 = vmatpush1.msra.mxu0 %v76
    %180 = vmatprep.subr.mxu0 0.0
    %181 = vmatpush1.msra.mxu0 %v77
    %182 = vmatprep.subr.mxu0 0.0
    %183 = vmatpush1.msra.mxu0 %v78
    %184 = vmatprep.subr.mxu0 0.0
    %185 = vmatpush1.msra.mxu0 %v79
    %186 = vmatprep.subr.mxu0 0.0
    %187 = vmatpush1.msra.mxu0 %v80
    %188 = vmatprep.subr.mxu0 0.0
    %189 = vmatpush1.msra.mxu0 0.0
    %190 = vmatprep.subr.mxu0 0.0
    %191 = vmatpush1.msra.mxu0 0.0
    %192 = vmatprep.subr.mxu0 0.0
    %193 = vmatpush1.msra.mxu0 0.0
    %194 = vmatprep.subr.mxu0 0.0
    %195 = vmatpush1.msra.mxu0 0.0
    %196 = vmatprep.subr.mxu0 0.0
    %197 = vmatpush1.msra.mxu0 0.0
    %198 = vmatprep.subr.mxu0 0.0
    %199 = vmatpush1.msra.mxu0 0.0
    %200 = vmatprep.subr.mxu0 0.0
    %201 = vmatpush1.msra.mxu0 0.0
    %202 = vmatprep.subr.mxu0 0.0
    %203 = vmatpush1.msra.mxu0 0.0
    %204 = vmatprep.subr.mxu0 0.0
    %205 = vmatpush1.msra.mxu0 0.0
    %206 = vmatprep.subr.mxu0 0.0
    %207 = vmatpush1.msra.mxu0 0.0
    %208 = vmatprep.subr.mxu0 0.0
    %209 = vmatpush1.msra.mxu0 0.0
    %210 = vmatprep.subr.mxu0 0.0
    %211 = vmatpush1.msra.mxu0 0.0
    %212 = vmatprep.subr.mxu0 0.0
    %213 = vmatpush1.msra.mxu0 0.0
    %214 = vmatprep.subr.mxu0 0.0
    %215 = vmatpush1.msra.mxu0 0.0
    %216 = vmatprep.subr.mxu0 0.0
    %217 = vmatpush1.msra.mxu0 0.0
    %218 = vmatprep.subr.mxu0 0.0
    %219 = vmatpush1.msra.mxu0 0.0
    %220 = vmatprep.mubr.f32.mxu0 0.0
    %221 = vmatmul.mubr.f32.gmra.mrb[0].mxu0 %v153
    %v222 = vpop.f32.mrb[0].mxu0
    %v223 = vadd.f32 0.0, %v222
    %v224 = vpop.f32.mrb[0].mxu0
    %225 = vdwg.mxu0
    %v226 = vadd.f32 %v155, %v223
    %s227 = scalar_lea.vmem [#allocation2], 2
    %v228 = vld [vmem:[%s227] sm:$0x1]
    %229 = vmatprep.subr.mxu0 0.0
    %230 = vmatpush1.msra.mxu0 %v65
    %231 = vmatprep.subr.mxu0 0.0
    %232 = vmatpush1.msra.mxu0 %v66
    %233 = vmatprep.subr.mxu0 0.0
    %234 = vmatpush1.msra.mxu0 %v67
    %235 = vmatprep.subr.mxu0 0.0
    %236 = vmatpush1.msra.mxu0 %v68
    %237 = vmatprep.subr.mxu0 0.0
    %238 = vmatpush1.msra.mxu0 %v69
    %239 = vmatprep.subr.mxu0 0.0
    %240 = vmatpush1.msra.mxu0 %v70
    %241 = vmatprep.subr.mxu0 0.0
    %242 = vmatpush1.msra.mxu0 %v71
    %243 = vmatprep.subr.mxu0 0.0
    %244 = vmatpush1.msra.mxu0 %v72
    %245 = vmatprep.subr.mxu0 0.0
    %246 = vmatpush1.msra.mxu0 %v73
    %247 = vmatprep.subr.mxu0 0.0
    %248 = vmatpush1.msra.mxu0 %v74
    %249 = vmatprep.subr.mxu0 0.0
    %250 = vmatpush1.msra.mxu0 %v75
    %251 = vmatprep.subr.mxu0 0.0
    %252 = vmatpush1.msra.mxu0 %v76
    %253 = vmatprep.subr.mxu0 0.0
    %254 = vmatpush1.msra.mxu0 %v77
    %255 = vmatprep.subr.mxu0 0.0
    %256 = vmatpush1.msra.mxu0 %v78
    %257 = vmatprep.subr.mxu0 0.0
    %258 = vmatpush1.msra.mxu0 %v79
    %259 = vmatprep.subr.mxu0 0.0
    %260 = vmatpush1.msra.mxu0 %v80
    %261 = vmatprep.subr.mxu0 0.0
    %262 = vmatpush1.msra.mxu0 0.0
    %263 = vmatprep.subr.mxu0 0.0
    %264 = vmatpush1.msra.mxu0 0.0
    %265 = vmatprep.subr.mxu0 0.0
    %266 = vmatpush1.msra.mxu0 0.0
    %267 = vmatprep.subr.mxu0 0.0
    %268 = vmatpush1.msra.mxu0 0.0
    %269 = vmatprep.subr.mxu0 0.0
    %270 = vmatpush1.msra.mxu0 0.0
    %271 = vmatprep.subr.mxu0 0.0
    %272 = vmatpush1.msra.mxu0 0.0
    %273 = vmatprep.subr.mxu0 0.0
    %274 = vmatpush1.msra.mxu0 0.0
    %275 = vmatprep.subr.mxu0 0.0
    %276 = vmatpush1.msra.mxu0 0.0
    %277 = vmatprep.subr.mxu0 0.0
    %278 = vmatpush1.msra.mxu0 0.0
    %279 = vmatprep.subr.mxu0 0.0
    %280 = vmatpush1.msra.mxu0 0.0
    %281 = vmatprep.subr.mxu0 0.0
    %282 = vmatpush1.msra.mxu0 0.0
    %283 = vmatprep.subr.mxu0 0.0
    %284 = vmatpush1.msra.mxu0 0.0
    %285 = vmatprep.subr.mxu0 0.0
    %286 = vmatpush1.msra.mxu0 0.0
    %287 = vmatprep.subr.mxu0 0.0
    %288 = vmatpush1.msra.mxu0 0.0
    %289 = vmatprep.subr.mxu0 0.0
    %290 = vmatpush1.msra.mxu0 0.0
    %291 = vmatprep.subr.mxu0 0.0
    %292 = vmatpush1.msra.mxu0 0.0
    %293 = vmatprep.mubr.f32.mxu0 0.0
    %294 = vmatmul.mubr.f32.gmra.mrb[0].mxu0 %v226
    %v295 = vpop.f32.mrb[0].mxu0
    %v296 = vadd.f32 0.0, %v295
    %v297 = vpop.f32.mrb[0].mxu0
    %298 = vdwg.mxu0
    %v299 = vadd.f32 %v228, %v296
    %s300 = scalar_lea.vmem [#allocation2], 3
    %v301 = vld [vmem:[%s300] sm:$0x1]
    %302 = vmatprep.subr.mxu0 0.0
    %303 = vmatpush1.msra.mxu0 %v65
    %304 = vmatprep.subr.mxu0 0.0
    %305 = vmatpush1.msra.mxu0 %v66
    %306 = vmatprep.subr.mxu0 0.0
    %307 = vmatpush1.msra.mxu0 %v67
    %308 = vmatprep.subr.mxu0 0.0
    %309 = vmatpush1.msra.mxu0 %v68
    %310 = vmatprep.subr.mxu0 0.0
    %311 = vmatpush1.msra.mxu0 %v69
    %312 = vmatprep.subr.mxu0 0.0
    %313 = vmatpush1.msra.mxu0 %v70
    %314 = vmatprep.subr.mxu0 0.0
    %315 = vmatpush1.msra.mxu0 %v71
    %316 = vmatprep.subr.mxu0 0.0
    %317 = vmatpush1.msra.mxu0 %v72
    %318 = vmatprep.subr.mxu0 0.0
    %319 = vmatpush1.msra.mxu0 %v73
    %320 = vmatprep.subr.mxu0 0.0
    %321 = vmatpush1.msra.mxu0 %v74
    %322 = vmatprep.subr.mxu0 0.0
    %323 = vmatpush1.msra.mxu0 %v75
    %324 = vmatprep.subr.mxu0 0.0
    %325 = vmatpush1.msra.mxu0 %v76
    %326 = vmatprep.subr.mxu0 0.0
    %327 = vmatpush1.msra.mxu0 %v77
    %328 = vmatprep.subr.mxu0 0.0
    %329 = vmatpush1.msra.mxu0 %v78
    %330 = vmatprep.subr.mxu0 0.0
    %331 = vmatpush1.msra.mxu0 %v79
    %332 = vmatprep.subr.mxu0 0.0
    %333 = vmatpush1.msra.mxu0 %v80
    %334 = vmatprep.subr.mxu0 0.0
    %335 = vmatpush1.msra.mxu0 0.0
    %336 = vmatprep.subr.mxu0 0.0
    %337 = vmatpush1.msra.mxu0 0.0
    %338 = vmatprep.subr.mxu0 0.0
    %339 = vmatpush1.msra.mxu0 0.0
    %340 = vmatprep.subr.mxu0 0.0
    %341 = vmatpush1.msra.mxu0 0.0
    %342 = vmatprep.subr.mxu0 0.0
    %343 = vmatpush1.msra.mxu0 0.0
    %344 = vmatprep.subr.mxu0 0.0
    %345 = vmatpush1.msra.mxu0 0.0
    %346 = vmatprep.subr.mxu0 0.0
    %347 = vmatpush1.msra.mxu0 0.0
    %348 = vmatprep.subr.mxu0 0.0
    %349 = vmatpush1.msra.mxu0 0.0
    %350 = vmatprep.subr.mxu0 0.0
    %351 = vmatpush1.msra.mxu0 0.0
    %352 = vmatprep.subr.mxu0 0.0
    %353 = vmatpush1.msra.mxu0 0.0
    %354 = vmatprep.subr.mxu0 0.0
    %355 = vmatpush1.msra.mxu0 0.0
    %356 = vmatprep.subr.mxu0 0.0
    %357 = vmatpush1.msra.mxu0 0.0
    %358 = vmatprep.subr.mxu0 0.0
    %359 = vmatpush1.msra.mxu0 0.0
    %360 = vmatprep.subr.mxu0 0.0
    %361 = vmatpush1.msra.mxu0 0.0
    %362 = vmatprep.subr.mxu0 0.0
    %363 = vmatpush1.msra.mxu0 0.0
    %364 = vmatprep.subr.mxu0 0.0
    %365 = vmatpush1.msra.mxu0 0.0
    %366 = vmatprep.mubr.f32.mxu0 0.0
    %367 = vmatmul.mubr.f32.gmra.mrb[0].mxu0 %v299
    %v368 = vpop.f32.mrb[0].mxu0
    %v369 = vadd.f32 0.0, %v368
    %v370 = vpop.f32.mrb[0].mxu0
    %371 = vdwg.mxu0
    %v372 = vadd.f32 %v301, %v369
    %s373 = scalar_lea.vmem [#allocation2], 4
    %v374 = vld [vmem:[%s373] sm:$0x1]
    %375 = vmatprep.subr.mxu0 0.0
    %376 = vmatpush1.msra.mxu0 %v65
    %377 = vmatprep.subr.mxu0 0.0
    %378 = vmatpush1.msra.mxu0 %v66
    %379 = vmatprep.subr.mxu0 0.0
    %380 = vmatpush1.msra.mxu0 %v67
    %381 = vmatprep.subr.mxu0 0.0
    %382 = vmatpush1.msra.mxu0 %v68
    %383 = vmatprep.subr.mxu0 0.0
    %384 = vmatpush1.msra.mxu0 %v69
    %385 = vmatprep.subr.mxu0 0.0
    %386 = vmatpush1.msra.mxu0 %v70
    %387 = vmatprep.subr.mxu0 0.0
    %388 = vmatpush1.msra.mxu0 %v71
    %389 = vmatprep.subr.mxu0 0.0
    %390 = vmatpush1.msra.mxu0 %v72
    %391 = vmatprep.subr.mxu0 0.0
    %392 = vmatpush1.msra.mxu0 %v73
    %393 = vmatprep.subr.mxu0 0.0
    %394 = vmatpush1.msra.mxu0 %v74
    %395 = vmatprep.subr.mxu0 0.0
    %396 = vmatpush1.msra.mxu0 %v75
    %397 = vmatprep.subr.mxu0 0.0
    %398 = vmatpush1.msra.mxu0 %v76
    %399 = vmatprep.subr.mxu0 0.0
    %400 = vmatpush1.msra.mxu0 %v77
    %401 = vmatprep.subr.mxu0 0.0
    %402 = vmatpush1.msra.mxu0 %v78
    %403 = vmatprep.subr.mxu0 0.0
    %404 = vmatpush1.msra.mxu0 %v79
    %405 = vmatprep.subr.mxu0 0.0
    %406 = vmatpush1.msra.mxu0 %v80
    %407 = vmatprep.subr.mxu0 0.0
    %408 = vmatpush1.msra.mxu0 0.0
    %409 = vmatprep.subr.mxu0 0.0
    %410 = vmatpush1.msra.mxu0 0.0
    %411 = vmatprep.subr.mxu0 0.0
    %412 = vmatpush1.msra.mxu0 0.0
    %413 = vmatprep.subr.mxu0 0.0
    %414 = vmatpush1.msra.mxu0 0.0
    %415 = vmatprep.subr.mxu0 0.0
    %416 = vmatpush1.msra.mxu0 0.0
    %417 = vmatprep.subr.mxu0 0.0
    %418 = vmatpush1.msra.mxu0 0.0
    %419 = vmatprep.subr.mxu0 0.0
    %420 = vmatpush1.msra.mxu0 0.0
    %421 = vmatprep.subr.mxu0 0.0
    %422 = vmatpush1.msra.mxu0 0.0
    %423 = vmatprep.subr.mxu0 0.0
    %424 = vmatpush1.msra.mxu0 0.0
    %425 = vmatprep.subr.mxu0 0.0
    %426 = vmatpush1.msra.mxu0 0.0
    %427 = vmatprep.subr.mxu0 0.0
    %428 = vmatpush1.msra.mxu0 0.0
    %429 = vmatprep.subr.mxu0 0.0
    %430 = vmatpush1.msra.mxu0 0.0
    %431 = vmatprep.subr.mxu0 0.0
    %432 = vmatpush1.msra.mxu0 0.0
    %433 = vmatprep.subr.mxu0 0.0
    %434 = vmatpush1.msra.mxu0 0.0
    %435 = vmatprep.subr.mxu0 0.0
    %436 = vmatpush1.msra.mxu0 0.0
    %437 = vmatprep.subr.mxu0 0.0
    %438 = vmatpush1.msra.mxu0 0.0
    %439 = vmatprep.mubr.f32.mxu0 0.0
    %440 = vmatmul.mubr.f32.gmra.mrb[0].mxu0 %v372
    %v441 = vpop.f32.mrb[0].mxu0
    %v442 = vadd.f32 0.0, %v441
    %v443 = vpop.f32.mrb[0].mxu0
    %444 = vdwg.mxu0
    %v445 = vadd.f32 %v374, %v442
    %s446 = scalar_lea.vmem [#allocation2], 5
    %v447 = vld [vmem:[%s446] sm:$0x1]
    %448 = vmatprep.subr.mxu0 0.0
    %449 = vmatpush1.msra.mxu0 %v65
    %450 = vmatprep.subr.mxu0 0.0
    %451 = vmatpush1.msra.mxu0 %v66
    %452 = vmatprep.subr.mxu0 0.0
    %453 = vmatpush1.msra.mxu0 %v67
    %454 = vmatprep.subr.mxu0 0.0
    %455 = vmatpush1.msra.mxu0 %v68
    %456 = vmatprep.subr.mxu0 0.0
    %457 = vmatpush1.msra.mxu0 %v69
    %458 = vmatprep.subr.mxu0 0.0
    %459 = vmatpush1.msra.mxu0 %v70
    %460 = vmatprep.subr.mxu0 0.0
    %461 = vmatpush1.msra.mxu0 %v71
    %462 = vmatprep.subr.mxu0 0.0
    %463 = vmatpush1.msra.mxu0 %v72
    %464 = vmatprep.subr.mxu0 0.0
    %465 = vmatpush1.msra.mxu0 %v73
    %466 = vmatprep.subr.mxu0 0.0
    %467 = vmatpush1.msra.mxu0 %v74
    %468 = vmatprep.subr.mxu0 0.0
    %469 = vmatpush1.msra.mxu0 %v75
    %470 = vmatprep.subr.mxu0 0.0
    %471 = vmatpush1.msra.mxu0 %v76
    %472 = vmatprep.subr.mxu0 0.0
    %473 = vmatpush1.msra.mxu0 %v77
    %474 = vmatprep.subr.mxu0 0.0
    %475 = vmatpush1.msra.mxu0 %v78
    %476 = vmatprep.subr.mxu0 0.0
    %477 = vmatpush1.msra.mxu0 %v79
    %478 = vmatprep.subr.mxu0 0.0
    %479 = vmatpush1.msra.mxu0 %v80
    %480 = vmatprep.subr.mxu0 0.0
    %481 = vmatpush1.msra.mxu0 0.0
    %482 = vmatprep.subr.mxu0 0.0
    %483 = vmatpush1.msra.mxu0 0.0
    %484 = vmatprep.subr.mxu0 0.0
    %485 = vmatpush1.msra.mxu0 0.0
    %486 = vmatprep.subr.mxu0 0.0
    %487 = vmatpush1.msra.mxu0 0.0
    %488 = vmatprep.subr.mxu0 0.0
    %489 = vmatpush1.msra.mxu0 0.0
    %490 = vmatprep.subr.mxu0 0.0
    %491 = vmatpush1.msra.mxu0 0.0
    %492 = vmatprep.subr.mxu0 0.0
    %493 = vmatpush1.msra.mxu0 0.0
    %494 = vmatprep.subr.mxu0 0.0
    %495 = vmatpush1.msra.mxu0 0.0
    %496 = vmatprep.subr.mxu0 0.0
    %497 = vmatpush1.msra.mxu0 0.0
    %498 = vmatprep.subr.mxu0 0.0
    %499 = vmatpush1.msra.mxu0 0.0
    %500 = vmatprep.subr.mxu0 0.0
    %501 = vmatpush1.msra.mxu0 0.0
    %502 = vmatprep.subr.mxu0 0.0
    %503 = vmatpush1.msra.mxu0 0.0
    %504 = vmatprep.subr.mxu0 0.0
    %505 = vmatpush1.msra.mxu0 0.0
    %506 = vmatprep.subr.mxu0 0.0
    %507 = vmatpush1.msra.mxu0 0.0
    %508 = vmatprep.subr.mxu0 0.0
    %509 = vmatpush1.msra.mxu0 0.0
    %510 = vmatprep.subr.mxu0 0.0
    %511 = vmatpush1.msra.mxu0 0.0
    %512 = vmatprep.mubr.f32.mxu0 0.0
    %513 = vmatmul.mubr.f32.gmra.mrb[0].mxu0 %v445
    %v514 = vpop.f32.mrb[0].mxu0
    %v515 = vadd.f32 0.0, %v514
    %v516 = vpop.f32.mrb[0].mxu0
    %517 = vdwg.mxu0
    %v518 = vadd.f32 %v447, %v515
    %519 = vst [vmem:[#allocation9] sm:$0x1] %v518
    %v520 = vld [vmem:[%s3] sm:$0x1]
    %v521 = vld [vmem:[#allocation7] sm:$0xff]
    %v522 = vld [vmem:[#allocation7 + $0x8] sm:$0xff]
    %v523 = vld [vmem:[#allocation7 + $0x10] sm:$0xff]
    %v524 = vld [vmem:[#allocation7 + $0x18] sm:$0xff]
    %v525 = vld [vmem:[#allocation7 + $0x20] sm:$0xff]
    %v526 = vld [vmem:[#allocation7 + $0x28] sm:$0xff]
    %v527 = vld [vmem:[#allocation7 + $0x30] sm:$0xff]
    %v528 = vld [vmem:[#allocation7 + $0x38] sm:$0xff]
    %v529 = vld [vmem:[#allocation7 + $0x40] sm:$0xff]
    %v530 = vld [vmem:[#allocation7 + $0x48] sm:$0xff]
    %v531 = vld [vmem:[#allocation7 + $0x50] sm:$0xff]
    %v532 = vld [vmem:[#allocation7 + $0x58] sm:$0xff]
    %v533 = vld [vmem:[#allocation7 + $0x60] sm:$0xff]
    %v534 = vld [vmem:[#allocation7 + $0x68] sm:$0xff]
    %v535 = vld [vmem:[#allocation7 + $0x70] sm:$0xff]
    %v536 = vld [vmem:[#allocation7 + $0x78] sm:$0xff]
    %537 = vmatprep.subr.mxu0 0.0
    %538 = vmatpush1.msra.mxu0 %v521
    %539 = vmatprep.subr.mxu0 0.0
    %540 = vmatpush1.msra.mxu0 %v522
    %541 = vmatprep.subr.mxu0 0.0
    %542 = vmatpush1.msra.mxu0 %v523
    %543 = vmatprep.subr.mxu0 0.0
    %544 = vmatpush1.msra.mxu0 %v524
    %545 = vmatprep.subr.mxu0 0.0
    %546 = vmatpush1.msra.mxu0 %v525
    %547 = vmatprep.subr.mxu0 0.0
    %548 = vmatpush1.msra.mxu0 %v526
    %549 = vmatprep.subr.mxu0 0.0
    %550 = vmatpush1.msra.mxu0 %v527
    %551 = vmatprep.subr.mxu0 0.0
    %552 = vmatpush1.msra.mxu0 %v528
    %553 = vmatprep.subr.mxu0 0.0
    %554 = vmatpush1.msra.mxu0 %v529
    %555 = vmatprep.subr.mxu0 0.0
    %556 = vmatpush1.msra.mxu0 %v530
    %557 = vmatprep.subr.mxu0 0.0
    %558 = vmatpush1.msra.mxu0 %v531
    %559 = vmatprep.subr.mxu0 0.0
    %560 = vmatpush1.msra.mxu0 %v532
    %561 = vmatprep.subr.mxu0 0.0
    %562 = vmatpush1.msra.mxu0 %v533
    %563 = vmatprep.subr.mxu0 0.0
    %564 = vmatpush1.msra.mxu0 %v534
    %565 = vmatprep.subr.mxu0 0.0
    %566 = vmatpush1.msra.mxu0 %v535
    %567 = vmatprep.subr.mxu0 0.0
    %568 = vmatpush1.msra.mxu0 %v536
    %569 = vmatprep.subr.mxu0 0.0
    %570 = vmatpush1.msra.mxu0 0.0
    %571 = vmatprep.subr.mxu0 0.0
    %572 = vmatpush1.msra.mxu0 0.0
    %573 = vmatprep.subr.mxu0 0.0
    %574 = vmatpush1.msra.mxu0 0.0
    %575 = vmatprep.subr.mxu0 0.0
    %576 = vmatpush1.msra.mxu0 0.0
    %577 = vmatprep.subr.mxu0 0.0
    %578 = vmatpush1.msra.mxu0 0.0
    %579 = vmatprep.subr.mxu0 0.0
    %580 = vmatpush1.msra.mxu0 0.0
    %581 = vmatprep.subr.mxu0 0.0
    %582 = vmatpush1.msra.mxu0 0.0
    %583 = vmatprep.subr.mxu0 0.0
    %584 = vmatpush1.msra.mxu0 0.0
    %585 = vmatprep.subr.mxu0 0.0
    %586 = vmatpush1.msra.mxu0 0.0
    %587 = vmatprep.subr.mxu0 0.0
    %588 = vmatpush1.msra.mxu0 0.0
    %589 = vmatprep.subr.mxu0 0.0
    %590 = vmatpush1.msra.mxu0 0.0
    %591 = vmatprep.subr.mxu0 0.0
    %592 = vmatpush1.msra.mxu0 0.0
    %593 = vmatprep.subr.mxu0 0.0
    %594 = vmatpush1.msra.mxu0 0.0
    %595 = vmatprep.subr.mxu0 0.0
    %596 = vmatpush1.msra.mxu0 0.0
    %597 = vmatprep.subr.mxu0 0.0
    %598 = vmatpush1.msra.mxu0 0.0
    %599 = vmatprep.subr.mxu0 0.0
    %600 = vmatpush1.msra.mxu0 0.0
    %601 = vmatprep.mubr.f32.mxu0 0.0
    %602 = vmatmul.mubr.f32.gmra.mrb[0].mxu0 %v445
    %v603 = vpop.f32.mrb[0].mxu0
    %v604 = vadd.f32 0.0, %v603
    %v605 = vpop.f32.mrb[0].mxu0
    %606 = vdwg.mxu0
    %v607 = vadd.f32 %v520, %v604
    %vm608 = vcmask 139264
    %v609 = vsel %vm608, %v607, -inf
    %610 = vmax.xlane.f32.xlu0 %v609
    %v611 = vpop.xlane.xlu0 %610
    %v612 = vsub.f32 %v607, %v611
    %v613 = vmul.f32 %v612, 1.442695
    %v614 = vpow.pop %v613
    %v615 = vsel %vm608, %v614, 0.0
    %616 = vadd.xlane.f32.xlu0 %v615
    %v617 = vpop.xlane.xlu0 %616
    %v618 = vlog2.pop %v617
    %v619 = vmul.f32 %v618, 0.6931472
    %v620 = vadd.f32 %v619, %v611
    %v621 = vsub.f32 %v607, %v620
    %622 = vst [vmem:[#allocation8] sm:$0x1] %v621
    // Predicated region
    $region34: #{tpu_custom_call.1} parent=1 // pred_check
      _
    $region35: #{tpu_custom_call.1} parent=1 // pred_check_branch
      %624 = sbr.rel (0) target = $region37
    $region36: #{tpu_custom_call.1} parent=1 // pred_region
      %s626 = ssub.s32 16, 16
      %627 = vsyncadd [#allocation4], %s626
      %s629 = sshll.u32 [#allocation8], 4
      %s630 = int_to_ptr.vmem [resolvable:$true] %s629
      %632 = dma.vmem_to_hbm [thread:$0]  %s630, 16, %s5, [#allocation4]
    $region37: #{tpu_custom_call.1} parent=1 // pred_fallthru
      _
    // Predicated region
    $region38: #{tpu_custom_call.1} parent=1 // pred_check
      _
    $region39: #{tpu_custom_call.1} parent=1 // pred_check_branch
      %634 = sbr.rel (0) target = $region41
    $region40: #{tpu_custom_call.1} parent=1 // pred_region
      %s636 = ssub.s32 16, 16
      %637 = vsyncadd [#allocation10], %s636
      %s639 = sshll.u32 [#allocation9], 4
      %s640 = int_to_ptr.vmem [resolvable:$true] %s639
      %642 = dma.vmem_to_hbm [thread:$0]  %s640, 16, %s6, [#allocation10]
    $region41: #{tpu_custom_call.1} parent=1 // pred_fallthru
      _
    // Predicated region
    $region42: #{tpu_custom_call.1} parent=1 // pred_check
      _
    $region43: #{tpu_custom_call.1} parent=1 // pred_check_branch
      %644 = sbr.rel (0) target = $region45
    $region44: #{tpu_custom_call.1} parent=1 // pred_region
      %645 = dma.done [#allocation4], 16
    $region45: #{tpu_custom_call.1} parent=1 // pred_fallthru
      _
    // Predicated region
    $region46: #{tpu_custom_call.1} parent=1 // pred_check
      _
    $region47: #{tpu_custom_call.1} parent=1 // pred_check_branch
      %647 = sbr.rel (0) target = $region49
    $region48: #{tpu_custom_call.1} parent=1 // pred_region
      %648 = dma.done [#allocation10], 16
    $region49: #{tpu_custom_call.1} parent=1 // pred_fallthru
      _
    %649 = vsyncpa [#allocation3], 1
    %650 = vsyncpa [#allocation6], 1
    %651 = vsyncpa [#allocation4], 1
    %652 = vsyncpa [#allocation10], 1

</llo_original>
